<compile_context>
chip_gen: v7x
topology: tpu7x:2x2x1
jax: 0.10.0
libtpu: 0.0.40
codegen_flags: <defaults>
</compile_context>

<pallas_src>
import numpy as np
import jax
import jax.numpy as jnp
from jax.experimental import pallas as pl
from jax.experimental.pallas import tpu as pltpu


def _poker_kernel(x_ref, fcw_ref, fcdw_ref, sign_ref, offd_ref,
                  j_ref, r_ref, a_ref, b_ref, d_ref):
    x = x_ref[...]                                   # (TB, 1)

    # nn.Linear(1, 2, bias=False) -> j[b, k] = x[b, 0] * W[k, 0]
    j = x * fcw_ref[...]                             # (TB,1)*(1,2) -> (TB,2)
    # nn.Linear(1, n, bias=False)
    logits = x * fcdw_ref[...]                       # (TB,1)*(1,n) -> (TB,n)

    # softmax over the feature axis (torch.nn.Softmax() on 2-D input -> dim=1)
    m = jnp.max(logits, axis=-1, keepdims=True)
    e = jnp.exp(logits - m)
    r = e * pl.reciprocal(jnp.sum(e, axis=-1, keepdims=True), approx=False)

    j_ref[...] = j
    r_ref[...] = r

    initial = j[:, 0:1][:, :, None]                  # (TB,1,1)
    traise = (j[:, 0:1] + j[:, 1:2])[:, :, None]     # initial + raiseval

    # probability_matrix = diag(1/(1-c)) @ (c c^T - diag(c)^2)
    # Reciprocal taken once on the (TB,n) row vector, then broadcast-multiplied.
    # NOTE: if softmax puts ~all mass on one card, 1-r -> 0 and the PyTorch reference
    # blows up identically; no clamping so semantics are preserved.
    inv1mr = pl.reciprocal(1.0 - r, approx=False)    # (TB, n)
    base = (r[:, :, None] * r[:, None, :]) * inv1mr[:, :, None]   # (TB, n, n)

    prob = base * offd_ref[...][None]                # zero the diagonal
    signed = base * sign_ref[...][None]              # sign mask is already 0 on the diagonal

    a_ref[...] = signed * initial                    # -> P[:, 0:2n:2,    0:2n:2]
    b_ref[...] = prob * initial                      # -> P[:, 2n:4n:2,   1:2n:2], -P[:, 1:2n:2, 2n:4n:2]
    d_ref[...] = signed * traise                     # -> P[:, 2n+1:4n:2, 1:2n:2],  P[:, 1:2n:2, 2n+1:4n:2]


def _round_up(v, m):
    return (v + m - 1) // m * m


def _pick_batch_tile(B, n, budget_bytes=8 * 1024 * 1024):
    """Largest batch tile whose double-buffered, (8,128)-padded VMEM footprint fits budget
    (budget chosen conservatively so it also fits v7x's smaller VMEM)."""
    row_bytes = 4 * (3 * _round_up(n, 8) * _round_up(n, 128)   # three payoff blocks
                     + _round_up(n, 128)                        # r
                     + 2 * 128)                                 # x, j (lane-padded)
    tb = int(budget_bytes // (2 * row_bytes))
    tb = max(8, min(tb, 1024))
    if tb >= B:
        return B
    return max(8, (tb // 8) * 8)


def one_card_poker_paynet(x, fc_weight, fc_dist_weight, nCards, *, batch_tile=None):
    """Forward pass of OneCardPokerPaynet (minus the external ZSGSeqSolver)."""
    B = x.shape[0]
    n = nCards
    x = x.astype(jnp.float32)
    fcw_t = fc_weight.astype(jnp.float32).T           # (1, 2)
    fcdw_t = fc_dist_weight.astype(jnp.float32).T     # (1, n)

    # Constant (n,n) masks, built once on the host.
    row = np.arange(n)[:, None]
    col = np.arange(n)[None, :]
    sign = jnp.asarray((col > row).astype(np.float32) - (col < row).astype(np.float32))
    offd = jnp.asarray((col != row).astype(np.float32))

    tb = batch_tile if batch_tile is not None else _pick_batch_tile(B, n)
    tb = min(tb, B)
    grid = (pl.cdiv(B, tb),)

    # Advisory cost estimate for XLA's scheduler.
    flops = int(B * (7 * n * n + 8 * n + 6))
    transcendentals = int(B * (2 * n + 1))
    bytes_accessed = int(4 * (B * (3 + n + 3 * n * n) + 2 + n + 2 * n * n))
    cost = pl.CostEstimate(flops=flops, transcendentals=transcendentals,
                           bytes_accessed=bytes_accessed)

    j, r, blk_a, blk_b, blk_d = pl.pallas_call(
        _poker_kernel,
        grid=grid,
        in_specs=[
            pl.BlockSpec((tb, 1), lambda i: (i, 0)),
            pl.BlockSpec((1, 2), lambda i: (0, 0)),
            pl.BlockSpec((1, n), lambda i: (0, 0)),
            pl.BlockSpec((n, n), lambda i: (0, 0)),
            pl.BlockSpec((n, n), lambda i: (0, 0)),
        ],
        out_specs=(
            pl.BlockSpec((tb, 2), lambda i: (i, 0)),
            pl.BlockSpec((tb, n), lambda i: (i, 0)),
            pl.BlockSpec((tb, n, n), lambda i: (i, 0, 0)),
            pl.BlockSpec((tb, n, n), lambda i: (i, 0, 0)),
            pl.BlockSpec((tb, n, n), lambda i: (i, 0, 0)),
        ),
        out_shape=(
            jax.ShapeDtypeStruct((B, 2), jnp.float32),
            jax.ShapeDtypeStruct((B, n), jnp.float32),
            jax.ShapeDtypeStruct((B, n, n), jnp.float32),
            jax.ShapeDtypeStruct((B, n, n), jnp.float32),
            jax.ShapeDtypeStruct((B, n, n), jnp.float32),
        ),
        compiler_params=pltpu.CompilerParams(
            dimension_semantics=("parallel",),
            vmem_limit_bytes=32 * 1024 * 1024,
        ),
        cost_estimate=cost,
    )(x, fcw_t, fcdw_t, sign, offd)

    # Single-interleave construction of the sparse payoff matrix P (B, 4n, 4n).
    # P is viewed as a 7-D tensor with axes (b, row_half, i, row_parity, col_half, j, col_parity):
    #   row = row_half*2n + 2*i + row_parity,  col = col_half*2n + 2*j + col_parity.
    # Built with stacks of the three blocks + zeros and one contiguous reshape, so XLA
    # writes P once instead of performing five full-P dynamic-update-slice copies.
    Z = jnp.zeros_like(blk_a)

    def col_slab(c00, c01, c10, c11):
        # c{col_half}{col_parity}: each (B,n,n) -> (B, n, 2, n, 2) = (b, i, col_half, j, col_parity)
        h0 = jnp.stack([c00, c01], axis=-1)
        h1 = jnp.stack([c10, c11], axis=-1)
        return jnp.stack([h0, h1], axis=2)

    s00 = col_slab(blk_a, Z, Z, Z)           # rows: half 0, parity 0
    s01 = col_slab(Z, Z, -blk_b, blk_d)      # rows: half 0, parity 1
    s10 = col_slab(Z, blk_b, Z, Z)           # rows: half 1, parity 0
    s11 = col_slab(Z, blk_d, Z, Z)           # rows: half 1, parity 1

    rh0 = jnp.stack([s00, s01], axis=2)      # (B, n, 2, 2, n, 2) = (b, i, rp, ch, j, cp)
    rh1 = jnp.stack([s10, s11], axis=2)
    P = jnp.stack([rh0, rh1], axis=1)        # (B, 2, n, 2, 2, n, 2) = (b, rh, i, rp, ch, j, cp)
    P = P.reshape(B, 4 * n, 4 * n)

    # TODO(synk): ZSGSeqSolver (producing u, v) is an external class not included in the
    # source; it has no Pallas equivalent here, so only (P, j, r) are returned.
    return P, j, r


def _reference_numpy(x, fc_w, fcd_w, nCards):
    """Pure-numpy transcription of the PyTorch forward (for correctness check)."""
    xn = np.asarray(x, np.float64)
    Wn = np.asarray(fc_w, np.float64)
    Wdn = np.asarray(fcd_w, np.float64)
    B, n = xn.shape[0], nCards
    j = xn @ Wn.T
    logits = xn @ Wdn.T
    e = np.exp(logits - logits.max(-1, keepdims=True))
    r = e / e.sum(-1, keepdims=True)
    initial = j[:, 0]
    traise = j[:, 0] + j[:, 1]
    cmp = np.zeros((n, n))
    cmp[np.triu_indices(n)] += 1.0
    cmp[np.tril_indices(n)] -= 1.0
    P = np.zeros((B, 4 * n, 4 * n))
    for b in range(B):
        c = r[b]
        outer = np.outer(c, c)
        corr = np.diag(c) ** 2
        prob = np.diag(1.0 / (1.0 - c)) @ (outer - corr)
        P[b, 0:2 * n:2, 0:2 * n:2] = cmp * prob * initial[b]
        P[b, 2 * n:4 * n:2, 1:2 * n:2] = prob * initial[b]
        P[b, 1:2 * n:2, 2 * n:4 * n:2] = -prob * initial[b]
        P[b, 2 * n + 1:4 * n:2, 1:2 * n:2] = cmp * prob * traise[b]
        P[b, 1:2 * n:2, 2 * n + 1:4 * n:2] = cmp * prob * traise[b]
    return P, j, r


if __name__ == "__main__":
    # Case 1: small demo shapes (batch=2, nCards=4), single batch tile.
    B, nCards = 2, 4
    key = jax.random.PRNGKey(0)
    k1, k2, k3 = jax.random.split(key, 3)
    # Shapes from the module's __init__:
    #   fc:      nn.Linear(1, 2, bias=False)      -> weight (2, 1)
    #   fc_dist: nn.Linear(1, nCards, bias=False) -> weight (nCards, 1)
    x = jax.random.normal(k1, (B, 1), jnp.float32)
    fc_w = 0.5 * jax.random.normal(k2, (2, 1), jnp.float32) + 1.0
    fcd_w = jax.random.normal(k3, (nCards, 1), jnp.float32)

    P, j, r = one_card_poker_paynet(x, fc_w, fcd_w, nCards)
    jax.block_until_ready((P, j, r))

    P_ref, j_ref, r_ref = _reference_numpy(x, fc_w, fcd_w, nCards)
    assert np.allclose(np.asarray(j), j_ref, atol=1e-5)
    assert np.allclose(np.asarray(r), r_ref, atol=1e-5)
    assert np.allclose(np.asarray(P), P_ref, atol=1e-5)

    # Case 2: exercise the batch-tiled grid path (grid > 1).
    B2, n2 = 16, 5
    k4, k5, k6 = jax.random.split(jax.random.PRNGKey(1), 3)
    x2 = jax.random.normal(k4, (B2, 1), jnp.float32)
    fc_w2 = 0.5 * jax.random.normal(k5, (2, 1), jnp.float32) + 1.0
    fcd_w2 = jax.random.normal(k6, (n2, 1), jnp.float32)

    P2, j2, r2 = one_card_poker_paynet(x2, fc_w2, fcd_w2, n2, batch_tile=8)
    jax.block_until_ready((P2, j2, r2))

    P2_ref, j2_ref, r2_ref = _reference_numpy(x2, fc_w2, fcd_w2, n2)
    assert np.allclose(np.asarray(j2), j2_ref, atol=1e-5)
    assert np.allclose(np.asarray(r2), r2_ref, atol=1e-5)
    assert np.allclose(np.asarray(P2), P2_ref, atol=1e-5)

    print("KERNEL_OK")
</pallas_src>

<mosaic_0001>
module attributes {stable_mosaic.version = 11 : i64} {
  func.func @_poker_kernel(%arg0: i32, %arg1: memref<2x1xf32, #tpu.memory_space<vmem>>, %arg2: memref<1x2xf32, #tpu.memory_space<vmem>>, %arg3: memref<1x4xf32, #tpu.memory_space<vmem>>, %arg4: memref<4x4xf32, #tpu.memory_space<vmem>>, %arg5: memref<4x4xf32, #tpu.memory_space<vmem>>, %arg6: memref<2x2xf32, #tpu.memory_space<vmem>>, %arg7: memref<2x4xf32, #tpu.memory_space<vmem>>, %arg8: memref<2x4x4xf32, #tpu.memory_space<vmem>>, %arg9: memref<2x4x4xf32, #tpu.memory_space<vmem>>, %arg10: memref<2x4x4xf32, #tpu.memory_space<vmem>>) attributes {dimension_semantics = [#tpu.dimension_semantics<parallel>], iteration_bounds = array<i64: 1>, scalar_prefetch = 0 : i64, scratch_operands = 0 : i64, tpu.core_type = #tpu.core_type<tc>, window_params = [{transform_indices = @transform_0, window_bounds = array<i64: 2, 1>}, {pipeline_mode = #tpu.pipeline_mode<synchronous>, transform_indices = @transform_1, window_bounds = array<i64: 1, 2>}, {pipeline_mode = #tpu.pipeline_mode<synchronous>, transform_indices = @transform_2, window_bounds = array<i64: 1, 4>}, {pipeline_mode = #tpu.pipeline_mode<synchronous>, transform_indices = @transform_3, window_bounds = array<i64: 4, 4>}, {pipeline_mode = #tpu.pipeline_mode<synchronous>, transform_indices = @transform_4, window_bounds = array<i64: 4, 4>}, {transform_indices = @transform_5, window_bounds = array<i64: 2, 2>}, {transform_indices = @transform_6, window_bounds = array<i64: 2, 4>}, {transform_indices = @transform_7, window_bounds = array<i64: 2, 4, 4>}, {transform_indices = @transform_8, window_bounds = array<i64: 2, 4, 4>}, {transform_indices = @transform_9, window_bounds = array<i64: 2, 4, 4>}]} {
    %c0 = arith.constant 0 : index
    %c0_0 = arith.constant 0 : index
    %0 = vector.load %arg1[%c0, %c0_0] : memref<2x1xf32, #tpu.memory_space<vmem>>, vector<2x1xf32>
    %c0_1 = arith.constant 0 : index
    %c0_2 = arith.constant 0 : index
    %1 = vector.load %arg2[%c0_1, %c0_2] : memref<1x2xf32, #tpu.memory_space<vmem>>, vector<1x2xf32>
    %2 = vector.broadcast %0 : vector<2x1xf32> to vector<2x2xf32>
    %3 = vector.broadcast %1 : vector<1x2xf32> to vector<2x2xf32>
    %4 = arith.mulf %2, %3 : vector<2x2xf32>
    %c0_3 = arith.constant 0 : index
    %c0_4 = arith.constant 0 : index
    %5 = vector.load %arg3[%c0_3, %c0_4] : memref<1x4xf32, #tpu.memory_space<vmem>>, vector<1x4xf32>
    %6 = vector.broadcast %0 : vector<2x1xf32> to vector<2x4xf32>
    %7 = vector.broadcast %5 : vector<1x4xf32> to vector<2x4xf32>
    %8 = arith.mulf %6, %7 : vector<2x4xf32>
    %cst = arith.constant dense<0xFF800000> : vector<2xf32>
    %9 = vector.multi_reduction <maximumf>, %8, %cst [1] : vector<2x4xf32> to vector<2xf32>
    %10 = vector.shape_cast %9 : vector<2xf32> to vector<2x1xf32>
    %11 = vector.broadcast %10 : vector<2x1xf32> to vector<2x4xf32>
    %12 = arith.subf %8, %11 : vector<2x4xf32>
    %13 = math.exp %12 : vector<2x4xf32>
    %cst_5 = arith.constant dense<0.000000e+00> : vector<2xf32>
    %14 = vector.multi_reduction <add>, %13, %cst_5 [1] : vector<2x4xf32> to vector<2xf32>
    %15 = vector.shape_cast %14 : vector<2xf32> to vector<2x1xf32>
    %16 = tpu.reciprocal %15 : vector<2x1xf32> -> vector<2x1xf32>
    %17 = vector.broadcast %16 : vector<2x1xf32> to vector<2x4xf32>
    %18 = arith.mulf %13, %17 : vector<2x4xf32>
    %c0_6 = arith.constant 0 : index
    %c0_7 = arith.constant 0 : index
    %19 = vector.load %arg6[%c0_6, %c0_7] : memref<2x2xf32, #tpu.memory_space<vmem>>, vector<2x2xf32>
    tpu.vector_store %arg6[%c0_6, %c0_7], %4 {strides = array<i32>} : memref<2x2xf32, #tpu.memory_space<vmem>>, vector<2x2xf32>,
    %c0_8 = arith.constant 0 : index
    %c0_9 = arith.constant 0 : index
    %20 = vector.load %arg7[%c0_8, %c0_9] : memref<2x4xf32, #tpu.memory_space<vmem>>, vector<2x4xf32>
    tpu.vector_store %arg7[%c0_8, %c0_9], %18 {strides = array<i32>} : memref<2x4xf32, #tpu.memory_space<vmem>>, vector<2x4xf32>,
    %21 = vector.extract_strided_slice %4 {offsets = [0, 0], sizes = [2, 1], strides = [1, 1]} : vector<2x2xf32> to vector<2x1xf32>
    %22 = vector.shape_cast %21 : vector<2x1xf32> to vector<2x1x1xf32>
    %23 = vector.extract_strided_slice %4 {offsets = [0, 0], sizes = [2, 1], strides = [1, 1]} : vector<2x2xf32> to vector<2x1xf32>
    %24 = vector.extract_strided_slice %4 {offsets = [0, 1], sizes = [2, 1], strides = [1, 1]} : vector<2x2xf32> to vector<2x1xf32>
    %25 = arith.addf %23, %24 : vector<2x1xf32>
    %26 = vector.shape_cast %25 : vector<2x1xf32> to vector<2x1x1xf32>
    %cst_10 = arith.constant 1.000000e+00 : f32
    %27 = vector.broadcast %cst_10 : f32 to vector<2x4xf32>
    %28 = arith.subf %27, %18 : vector<2x4xf32>
    %29 = tpu.reciprocal %28 : vector<2x4xf32> -> vector<2x4xf32>
    %30 = vector.shape_cast %18 : vector<2x4xf32> to vector<2x4x1xf32>
    %31 = vector.shape_cast %18 : vector<2x4xf32> to vector<2x1x4xf32>
    %32 = vector.broadcast %30 : vector<2x4x1xf32> to vector<2x4x4xf32>
    %33 = vector.broadcast %31 : vector<2x1x4xf32> to vector<2x4x4xf32>
    %34 = arith.mulf %32, %33 : vector<2x4x4xf32>
    %35 = vector.shape_cast %29 : vector<2x4xf32> to vector<2x4x1xf32>
    %36 = vector.broadcast %35 : vector<2x4x1xf32> to vector<2x4x4xf32>
    %37 = arith.mulf %34, %36 : vector<2x4x4xf32>
    %c0_11 = arith.constant 0 : index
    %c0_12 = arith.constant 0 : index
    %38 = vector.load %arg5[%c0_11, %c0_12] : memref<4x4xf32, #tpu.memory_space<vmem>>, vector<4x4xf32>
    %39 = vector.shape_cast %38 : vector<4x4xf32> to vector<1x4x4xf32>
    %40 = vector.broadcast %39 : vector<1x4x4xf32> to vector<2x4x4xf32>
    %41 = arith.mulf %37, %40 : vector<2x4x4xf32>
    %c0_13 = arith.constant 0 : index
    %c0_14 = arith.constant 0 : index
    %42 = vector.load %arg4[%c0_13, %c0_14] : memref<4x4xf32, #tpu.memory_space<vmem>>, vector<4x4xf32>
    %43 = vector.shape_cast %42 : vector<4x4xf32> to vector<1x4x4xf32>
    %44 = vector.broadcast %43 : vector<1x4x4xf32> to vector<2x4x4xf32>
    %45 = arith.mulf %37, %44 : vector<2x4x4xf32>
    %46 = vector.broadcast %22 : vector<2x1x1xf32> to vector<2x4x4xf32>
    %47 = arith.mulf %45, %46 : vector<2x4x4xf32>
    %c0_15 = arith.constant 0 : index
    %c0_16 = arith.constant 0 : index
    %c0_17 = arith.constant 0 : index
    %48 = vector.load %arg8[%c0_15, %c0_16, %c0_17] : memref<2x4x4xf32, #tpu.memory_space<vmem>>, vector<2x4x4xf32>
    tpu.vector_store %arg8[%c0_15, %c0_16, %c0_17], %47 {strides = array<i32>} : memref<2x4x4xf32, #tpu.memory_space<vmem>>, vector<2x4x4xf32>,
    %49 = vector.broadcast %22 : vector<2x1x1xf32> to vector<2x4x4xf32>
    %50 = arith.mulf %41, %49 : vector<2x4x4xf32>
    %c0_18 = arith.constant 0 : index
    %c0_19 = arith.constant 0 : index
    %c0_20 = arith.constant 0 : index
    %51 = vector.load %arg9[%c0_18, %c0_19, %c0_20] : memref<2x4x4xf32, #tpu.memory_space<vmem>>, vector<2x4x4xf32>
    tpu.vector_store %arg9[%c0_18, %c0_19, %c0_20], %50 {strides = array<i32>} : memref<2x4x4xf32, #tpu.memory_space<vmem>>, vector<2x4x4xf32>,
    %52 = vector.broadcast %26 : vector<2x1x1xf32> to vector<2x4x4xf32>
    %53 = arith.mulf %45, %52 : vector<2x4x4xf32>
    %c0_21 = arith.constant 0 : index
    %c0_22 = arith.constant 0 : index
    %c0_23 = arith.constant 0 : index
    %54 = vector.load %arg10[%c0_21, %c0_22, %c0_23] : memref<2x4x4xf32, #tpu.memory_space<vmem>>, vector<2x4x4xf32>
    tpu.vector_store %arg10[%c0_21, %c0_22, %c0_23], %53 {strides = array<i32>} : memref<2x4x4xf32, #tpu.memory_space<vmem>>, vector<2x4x4xf32>,
    return
  }
  func.func @transform_0(%arg0: i32) -> (i32, i32) {
    %c0_i32 = arith.constant 0 : i32
    %c0_i32_0 = arith.constant 0 : i32
    return %arg0, %c0_i32 : i32, i32
  }
  func.func @transform_1(%arg0: i32) -> (i32, i32) {
    %c0_i32 = arith.constant 0 : i32
    %c0_i32_0 = arith.constant 0 : i32
    %c0_i32_1 = arith.constant 0 : i32
    return %c0_i32, %c0_i32_0 : i32, i32
  }
  func.func @transform_2(%arg0: i32) -> (i32, i32) {
    %c0_i32 = arith.constant 0 : i32
    %c0_i32_0 = arith.constant 0 : i32
    %c0_i32_1 = arith.constant 0 : i32
    return %c0_i32, %c0_i32_0 : i32, i32
  }
  func.func @transform_3(%arg0: i32) -> (i32, i32) {
    %c0_i32 = arith.constant 0 : i32
    %c0_i32_0 = arith.constant 0 : i32
    %c0_i32_1 = arith.constant 0 : i32
    return %c0_i32, %c0_i32_0 : i32, i32
  }
  func.func @transform_4(%arg0: i32) -> (i32, i32) {
    %c0_i32 = arith.constant 0 : i32
    %c0_i32_0 = arith.constant 0 : i32
    %c0_i32_1 = arith.constant 0 : i32
    return %c0_i32, %c0_i32_0 : i32, i32
  }
  func.func @transform_5(%arg0: i32) -> (i32, i32) {
    %c0_i32 = arith.constant 0 : i32
    %c0_i32_0 = arith.constant 0 : i32
    return %arg0, %c0_i32 : i32, i32
  }
  func.func @transform_6(%arg0: i32) -> (i32, i32) {
    %c0_i32 = arith.constant 0 : i32
    %c0_i32_0 = arith.constant 0 : i32
    return %arg0, %c0_i32 : i32, i32
  }
  func.func @transform_7(%arg0: i32) -> (i32, i32, i32) {
    %c0_i32 = arith.constant 0 : i32
    %c0_i32_0 = arith.constant 0 : i32
    %c0_i32_1 = arith.constant 0 : i32
    return %arg0, %c0_i32, %c0_i32_0 : i32, i32, i32
  }
  func.func @transform_8(%arg0: i32) -> (i32, i32, i32) {
    %c0_i32 = arith.constant 0 : i32
    %c0_i32_0 = arith.constant 0 : i32
    %c0_i32_1 = arith.constant 0 : i32
    return %arg0, %c0_i32, %c0_i32_0 : i32, i32, i32
  }
  func.func @transform_9(%arg0: i32) -> (i32, i32, i32) {
    %c0_i32 = arith.constant 0 : i32
    %c0_i32_0 = arith.constant 0 : i32
    %c0_i32_1 = arith.constant 0 : i32
    return %arg0, %c0_i32, %c0_i32_0 : i32, i32, i32
  }
}

</mosaic_0001>

<llo_original>
// kernel: tpu_custom_call.1
$region0: #{tpu_custom_call.1}
  #allocation0 [shape = 'u32[]', space=smem, size = 0x4, offset = 0x4, fixed_abs, tag = 'smem constant byte address 0x4 - core index']
  #allocation1 [shape = 'u32[144,128]{1,0:T(1,128)}', space=vmem, size = 0x12000, scoped, tag = 'internal scratch']
  %s0 = inlined_call_operand.vmem [shape: f32[2,1], index: 0, kind: input, shape index: {}]
  %s1 = inlined_call_operand.vmem [shape: f32[1,2], index: 1, kind: input, shape index: {}]
  %s2 = inlined_call_operand.vmem [shape: f32[1,4], index: 2, kind: input, shape index: {}]
  %s3 = inlined_call_operand.vmem [shape: f32[4,4], index: 3, kind: input, shape index: {}]
  %s4 = inlined_call_operand.vmem [shape: f32[4,4], index: 4, kind: input, shape index: {}]
  %s5 = inlined_call_operand.hbm [shape: f32[2,2], index: 5, kind: output, shape index: {0}]
  %s6 = inlined_call_operand.hbm [shape: f32[2,4], index: 6, kind: output, shape index: {1}]
  %s7 = inlined_call_operand.hbm [shape: f32[2,4,4], index: 7, kind: output, shape index: {2}]
  %s8 = inlined_call_operand.hbm [shape: f32[2,4,4], index: 8, kind: output, shape index: {3}]
  %s9 = inlined_call_operand.hbm [shape: f32[2,4,4], index: 9, kind: output, shape index: {4}]
  %10 = xla_tuple %s5, %s6, %s7, %s8, %s9
  %s11 = sld [smem:[#allocation0]]
  $region62: #{tpu_custom_call.1} parent=0
    _
  %s13 = ssub.s32 1, %s11
  %s14 = scalar_select 0, %s13, %s11
  $region1: #{tpu_custom_call.1} parent=0
    #allocation2 [shape = 'u8[1024]{0}', space=vmem, size = 0x400, scoped, tag = 'output window, operand 0, single buffered']
    #allocation3 [shape = 's32[1]{0}', space=sflag, size = 0x4, scoped, tag = 'scoped memory for tpu_custom_call.1']
    #allocation4 [shape = 'u8[1024]{0}', space=vmem, size = 0x400, scoped, tag = 'output window, operand 1, single buffered']
    #allocation5 [shape = 's32[1]{0}', space=sflag, size = 0x4, scoped, tag = 'scoped memory for tpu_custom_call.1']
    #allocation6 [shape = 'u8[4096]{0}', space=vmem, size = 0x1000, scoped, tag = 'output window, operand 2, single buffered']
    #allocation7 [shape = 'u8[4096]{0}', space=vmem, size = 0x1000, scoped, tag = 'output window, operand 3, single buffered']
    #allocation8 [shape = 's32[1]{0}', space=sflag, size = 0x4, scoped, tag = 'scoped memory for tpu_custom_call.1']
    #allocation9 [shape = 'u8[4096]{0}', space=vmem, size = 0x1000, scoped, tag = 'output window, operand 4, single buffered']
    %15 = vsyncpa [#allocation3], 0
    %16 = vsyncpa [#allocation5], 0
    %17 = vsyncpa [#allocation8], 0
    // Predicated region
    $region2: #{tpu_custom_call.1} parent=1 // pred_check
      _
    $region3: #{tpu_custom_call.1} parent=1 // pred_check_branch
      %19 = sbr.rel (0) target = $region5
    $region4: #{tpu_custom_call.1} parent=1 // pred_region
      _
    $region5: #{tpu_custom_call.1} parent=1 // pred_fallthru
      _
    // Predicated region
    $region6: #{tpu_custom_call.1} parent=1 // pred_check
      _
    $region7: #{tpu_custom_call.1} parent=1 // pred_check_branch
      %21 = sbr.rel (0) target = $region9
    $region8: #{tpu_custom_call.1} parent=1 // pred_region
      _
    $region9: #{tpu_custom_call.1} parent=1 // pred_fallthru
      _
    // Predicated region
    $region10: #{tpu_custom_call.1} parent=1 // pred_check
      _
    $region11: #{tpu_custom_call.1} parent=1 // pred_check_branch
      %23 = sbr.rel (0) target = $region13
    $region12: #{tpu_custom_call.1} parent=1 // pred_region
      _
    $region13: #{tpu_custom_call.1} parent=1 // pred_fallthru
      _
    // Predicated region
    $region14: #{tpu_custom_call.1} parent=1 // pred_check
      _
    $region15: #{tpu_custom_call.1} parent=1 // pred_check_branch
      %25 = sbr.rel (0) target = $region17
    $region16: #{tpu_custom_call.1} parent=1 // pred_region
      _
    $region17: #{tpu_custom_call.1} parent=1 // pred_fallthru
      _
    // Predicated region
    $region18: #{tpu_custom_call.1} parent=1 // pred_check
      _
    $region19: #{tpu_custom_call.1} parent=1 // pred_check_branch
      %27 = sbr.rel (0) target = $region21
    $region20: #{tpu_custom_call.1} parent=1 // pred_region
      _
    $region21: #{tpu_custom_call.1} parent=1 // pred_fallthru
      _
    %v28 = vld [vmem:[%s0] sm:$0x3]
    %v29 = vld [vmem:[%s1] sm:$0x1]
    %31 = vset.pattern.permute.xlu0 0
    %32 = vperm.xlu0 %31, %v28
    %v33 = vpop.permute.xlu0 %32
    %v36 = vlaneseq
    %v37 = vshrl.u32 %v36, 7
    %v38 = vsub.s32 0, %v37
    %v39 = vrot.slane %v29, %v38
    %v41 = vmul.f32 %v33, %v39
    %v42 = vld [vmem:[%s2] sm:$0x1]
    %v44 = vlaneseq
    %v45 = vshrl.u32 %v44, 7
    %v46 = vsub.s32 0, %v45
    %v47 = vrot.slane %v42, %v46
    %v49 = vmul.f32 %v33, %v47
    %vm50 = vcmask 25600
    %v51 = vsel %vm50, %v49, -inf
    %52 = vmax.xlane.f32.xlu0 %v51
    %v53 = vpop.xlane.xlu0 %52
    %v54 = vsub.f32 %v49, %v53
    %v55 = vmul.f32 %v54, 1.442695
    %v56 = vpow.pop %v55
    %v57 = vsel %vm50, %v56, 0.0
    %58 = vadd.xlane.f32.xlu0 %v57
    %v59 = vpop.xlane.xlu0 %58
    %v60 = vrcp.pop %v59
    %v61 = vmul.f32 %v56, %v60
    %vm62 = vcmask 9216
    %63 = vst.msk [vmem:[#allocation2] sm:$0x3] %vm62, %v41
    %64 = vst.msk [vmem:[#allocation4] sm:$0x3] %vm50, %v61
    %v67 = vunpack.c.l.s4 1966171168
    %v68 = vunpack.c.0.s8 %v67
    %v69 = vlaneseq
    %v70 = vshrl.u32 %v69, 7
    %v71 = vsub.s32 %v68, %v70
    %v72 = vrot.slane %v41, %v71
    %v73 = vcombine.high %v72, %v72
    %v75 = vunpack.c.l.s4 1966171168
    %v76 = vunpack.c.0.s8 %v75
    %v77 = vlaneseq
    %v78 = vshrl.u32 %v77, 7
    %v79 = vsub.s32 %v76, %v78
    %v80 = vrot.slane %v72, %v79
    %v82 = vunpack.c.l.s4 1966171168
    %v83 = vunpack.c.0.s8 %v82
    %v84 = vlaneseq
    %v85 = vshrl.u32 %v84, 7
    %v86 = vsub.s32 %v83, %v85
    %v87 = vrot.slane %v73, %v86
    %88 = vrot.lane.b32.xlu0 %v41, 127
    %v89 = vpop.permute.xlu0 %88
    %v91 = vadd.f32 %v41, %v89
    %v94 = vunpack.c.l.s4 1966171168
    %v95 = vunpack.c.0.s8 %v94
    %v96 = vlaneseq
    %v97 = vshrl.u32 %v96, 7
    %v98 = vsub.s32 %v95, %v97
    %v99 = vrot.slane %v91, %v98
    %v100 = vcombine.high %v99, %v99
    %v102 = vunpack.c.l.s4 1966171168
    %v103 = vunpack.c.0.s8 %v102
    %v104 = vlaneseq
    %v105 = vshrl.u32 %v104, 7
    %v106 = vsub.s32 %v103, %v105
    %v107 = vrot.slane %v99, %v106
    %v109 = vunpack.c.l.s4 1966171168
    %v110 = vunpack.c.0.s8 %v109
    %v111 = vlaneseq
    %v112 = vshrl.u32 %v111, 7
    %v113 = vsub.s32 %v110, %v112
    %v114 = vrot.slane %v100, %v113
    %v115 = vsub.f32 1.0, %v61
    %v116 = vrcp.pop %v115
    %v117 = vlaneseq
    %v118 = vshrl.u32 %v117, 7
    %v119 = vsub.s32 0, %v118
    %v120 = vrot.slane %v61, %v119
    %122 = vbcast.lane.b32.xlu0 %v120, 256
    %v123 = vpop.permute.xlu0 %122
    %v124 = vlaneseq
    %v125 = vshrl.u32 %v124, 7
    %v126 = vsub.s32 1, %v125
    %v127 = vrot.slane %v61, %v126
    %129 = vbcast.lane.b32.xlu0 %v127, 256
    %v130 = vpop.permute.xlu0 %129
    %v133 = vunpack.c.l.s4 1966171168
    %v134 = vunpack.c.0.s8 %v133
    %v135 = vlaneseq
    %v136 = vshrl.u32 %v135, 7
    %v137 = vsub.s32 %v134, %v136
    %v138 = vrot.slane %v61, %v137
    %v139 = vcombine.high %v138, %v138
    %v141 = vunpack.c.l.s4 1966171168
    %v142 = vunpack.c.0.s8 %v141
    %v143 = vlaneseq
    %v144 = vshrl.u32 %v143, 7
    %v145 = vsub.s32 %v142, %v144
    %v146 = vrot.slane %v138, %v145
    %v148 = vunpack.c.l.s4 1966171168
    %v149 = vunpack.c.0.s8 %v148
    %v150 = vlaneseq
    %v151 = vshrl.u32 %v150, 7
    %v152 = vsub.s32 %v149, %v151
    %v153 = vrot.slane %v139, %v152
    %v154 = vlaneseq
    %v155 = vshrl.u32 %v154, 7
    %v156 = vsub.s32 0, %v155
    %v157 = vrot.slane %v146, %v156
    %v158 = vlaneseq
    %v159 = vshrl.u32 %v158, 7
    %v160 = vsub.s32 0, %v159
    %v161 = vrot.slane %v153, %v160
    %v164 = vmul.f32 %v123, %v157
    %v165 = vmul.f32 %v130, %v161
    %v166 = vlaneseq
    %v167 = vshrl.u32 %v166, 7
    %v168 = vsub.s32 0, %v167
    %v169 = vrot.slane %v116, %v168
    %171 = vbcast.lane.b32.xlu0 %v169, 256
    %v172 = vpop.permute.xlu0 %171
    %v173 = vlaneseq
    %v174 = vshrl.u32 %v173, 7
    %v175 = vsub.s32 1, %v174
    %v176 = vrot.slane %v116, %v175
    %178 = vbcast.lane.b32.xlu0 %v176, 256
    %v179 = vpop.permute.xlu0 %178
    %v180 = vmul.f32 %v164, %v172
    %v181 = vmul.f32 %v165, %v179
    %v182 = vld [vmem:[%s4] sm:$0xf]
    %v183 = vmul.f32 %v180, %v182
    %v184 = vmul.f32 %v181, %v182
    %v185 = vld [vmem:[%s3] sm:$0xf]
    %v186 = vmul.f32 %v180, %v185
    %v187 = vmul.f32 %v181, %v185
    %v188 = vlaneseq
    %v189 = vshrl.u32 %v188, 7
    %v190 = vsub.s32 0, %v189
    %v191 = vrot.slane %v80, %v190
    %v192 = vlaneseq
    %v193 = vshrl.u32 %v192, 7
    %v194 = vsub.s32 0, %v193
    %v195 = vrot.slane %v87, %v194
    %196 = vset.pattern.permute.xlu0 0
    %197 = vperm.xlu0 %196, %v191
    %v198 = vpop.permute.xlu0 %197
    %200 = vset.pattern.permute.xlu0 0
    %201 = vperm.xlu0 %200, %v195
    %v202 = vpop.permute.xlu0 %201
    %v204 = vmul.f32 %v186, %v198
    %v205 = vmul.f32 %v187, %v202
    %vm206 = vcmask 27648
    %207 = vst.msk [vmem:[#allocation6] sm:$0xf] %vm206, %v204
    %208 = vst.msk [vmem:[#allocation6 + $0x4] sm:$0xf] %vm206, %v205
    %v209 = vmul.f32 %v183, %v198
    %v210 = vmul.f32 %v184, %v202
    %211 = vst.msk [vmem:[#allocation7] sm:$0xf] %vm206, %v209
    %212 = vst.msk [vmem:[#allocation7 + $0x4] sm:$0xf] %vm206, %v210
    %v213 = vlaneseq
    %v214 = vshrl.u32 %v213, 7
    %v215 = vsub.s32 0, %v214
    %v216 = vrot.slane %v107, %v215
    %v217 = vlaneseq
    %v218 = vshrl.u32 %v217, 7
    %v219 = vsub.s32 0, %v218
    %v220 = vrot.slane %v114, %v219
    %221 = vset.pattern.permute.xlu0 0
    %222 = vperm.xlu0 %221, %v216
    %v223 = vpop.permute.xlu0 %222
    %225 = vset.pattern.permute.xlu0 0
    %226 = vperm.xlu0 %225, %v220
    %v227 = vpop.permute.xlu0 %226
    %v229 = vmul.f32 %v186, %v223
    %v230 = vmul.f32 %v187, %v227
    %231 = vst.msk [vmem:[#allocation9] sm:$0xf] %vm206, %v229
    %232 = vst.msk [vmem:[#allocation9 + $0x4] sm:$0xf] %vm206, %v230
    // Predicated region
    $region22: #{tpu_custom_call.1} parent=1 // pred_check
      _
    $region23: #{tpu_custom_call.1} parent=1 // pred_check_branch
      %234 = sbr.rel (0) target = $region25
    $region24: #{tpu_custom_call.1} parent=1 // pred_region
      %s236 = ssub.s32 32, 32
      %237 = vsyncadd [#allocation3], %s236
      %s239 = sshll.u32 [#allocation2], 4
      %s240 = int_to_ptr.vmem [resolvable:$true] %s239
      %242 = dma.vmem_to_hbm [thread:$0]  %s240, 32, %s5, [#allocation3]
    $region25: #{tpu_custom_call.1} parent=1 // pred_fallthru
      _
    // Predicated region
    $region26: #{tpu_custom_call.1} parent=1 // pred_check
      _
    $region27: #{tpu_custom_call.1} parent=1 // pred_check_branch
      %244 = sbr.rel (0) target = $region29
    $region28: #{tpu_custom_call.1} parent=1 // pred_region
      %s246 = ssub.s32 32, 32
      %247 = vsyncadd [#allocation5], %s246
      %s249 = sshll.u32 [#allocation4], 4
      %s250 = int_to_ptr.vmem [resolvable:$true] %s249
      %252 = dma.vmem_to_hbm [thread:$0]  %s250, 32, %s6, [#allocation5]
    $region29: #{tpu_custom_call.1} parent=1 // pred_fallthru
      _
    // Predicated region
    $region30: #{tpu_custom_call.1} parent=1 // pred_check
      _
    $region31: #{tpu_custom_call.1} parent=1 // pred_check_branch
      %254 = sbr.rel (0) target = $region33
    $region32: #{tpu_custom_call.1} parent=1 // pred_region
      %s256 = ssub.s32 128, 128
      %257 = vsyncadd [#allocation5], %s256
      %s258 = sshll.u32 [#allocation6], 4
      %s259 = int_to_ptr.vmem [resolvable:$true] %s258
      %264 = dma.vmem_to_hbm [thread:$0]  %s259, 128, %s7, [#allocation5], 64, 64, 4
    $region33: #{tpu_custom_call.1} parent=1 // pred_fallthru
      _
    // Predicated region
    $region34: #{tpu_custom_call.1} parent=1 // pred_check
      _
    $region35: #{tpu_custom_call.1} parent=1 // pred_check_branch
      %266 = sbr.rel (0) target = $region37
    $region36: #{tpu_custom_call.1} parent=1 // pred_region
      %s268 = ssub.s32 128, 128
      %269 = vsyncadd [#allocation8], %s268
      %s270 = sshll.u32 [#allocation7], 4
      %s271 = int_to_ptr.vmem [resolvable:$true] %s270
      %276 = dma.vmem_to_hbm [thread:$0]  %s271, 128, %s8, [#allocation8], 64, 64, 4
    $region37: #{tpu_custom_call.1} parent=1 // pred_fallthru
      _
    // Predicated region
    $region38: #{tpu_custom_call.1} parent=1 // pred_check
      _
    $region39: #{tpu_custom_call.1} parent=1 // pred_check_branch
      %278 = sbr.rel (0) target = $region41
    $region40: #{tpu_custom_call.1} parent=1 // pred_region
      %s280 = ssub.s32 128, 128
      %281 = vsyncadd [#allocation8], %s280
      %s282 = sshll.u32 [#allocation9], 4
      %s283 = int_to_ptr.vmem [resolvable:$true] %s282
      %288 = dma.vmem_to_hbm [thread:$0]  %s283, 128, %s9, [#allocation8], 64, 64, 4
    $region41: #{tpu_custom_call.1} parent=1 // pred_fallthru
      _
    // Predicated region
    $region42: #{tpu_custom_call.1} parent=1 // pred_check
      _
    $region43: #{tpu_custom_call.1} parent=1 // pred_check_branch
      %290 = sbr.rel (0) target = $region45
    $region44: #{tpu_custom_call.1} parent=1 // pred_region
      %291 = dma.done [#allocation3], 32
    $region45: #{tpu_custom_call.1} parent=1 // pred_fallthru
      _
    // Predicated region
    $region46: #{tpu_custom_call.1} parent=1 // pred_check
      _
    $region47: #{tpu_custom_call.1} parent=1 // pred_check_branch
      %293 = sbr.rel (0) target = $region49
    $region48: #{tpu_custom_call.1} parent=1 // pred_region
      %294 = dma.done [#allocation5], 32
    $region49: #{tpu_custom_call.1} parent=1 // pred_fallthru
      _
    // Predicated region
    $region50: #{tpu_custom_call.1} parent=1 // pred_check
      _
    $region51: #{tpu_custom_call.1} parent=1 // pred_check_branch
      %296 = sbr.rel (0) target = $region53
    $region52: #{tpu_custom_call.1} parent=1 // pred_region
      %297 = dma.done [#allocation5], 128
    $region53: #{tpu_custom_call.1} parent=1 // pred_fallthru
      _
    // Predicated region
    $region54: #{tpu_custom_call.1} parent=1 // pred_check
      _
    $region55: #{tpu_custom_call.1} parent=1 // pred_check_branch
      %299 = sbr.rel (0) target = $region57
    $region56: #{tpu_custom_call.1} parent=1 // pred_region
      %300 = dma.done [#allocation8], 128
    $region57: #{tpu_custom_call.1} parent=1 // pred_fallthru
      _
    // Predicated region
    $region58: #{tpu_custom_call.1} parent=1 // pred_check
      _
    $region59: #{tpu_custom_call.1} parent=1 // pred_check_branch
      %302 = sbr.rel (0) target = $region61
    $region60: #{tpu_custom_call.1} parent=1 // pred_region
      %303 = dma.done [#allocation8], 128
    $region61: #{tpu_custom_call.1} parent=1 // pred_fallthru
      _
    %304 = vsyncpa [#allocation3], 1
    %305 = vsyncpa [#allocation5], 1
    %306 = vsyncpa [#allocation8], 1

</llo_original>
